<compile_context>
chip_gen: v7x
topology: tpu7x:2x2x1
jax: 0.10.0
libtpu: 0.0.40
codegen_flags: <defaults>
</compile_context>

<pallas_src>
import jax
import jax.numpy as jnp
from jax.experimental import pallas as pl
from jax.experimental.pallas import tpu as pltpu


def _channel_attention_kernel(x_ref, w1t_ref, w2t_ref, o_ref):
    # x_ref: (Bt, C, H*W) image block, w1t: (C, Cr), w2t: (Cr, C), o: (Bt, C)
    x = x_ref[...].astype(jnp.float32)            # (Bt, C, HW)

    # Global average / max pool == reductions over the (lane-dense) last axis.
    avg = jnp.mean(x, axis=-1)                    # (Bt, C)
    mx = jnp.max(x, axis=-1)                      # (Bt, C)

    w1t = w1t_ref[...]                            # (C, Cr)  == fc1.weight^T
    w2t = w2t_ref[...]                            # (Cr, C)  == fc2.weight^T

    # fc2(relu(fc1(avg))) + fc2(relu(fc1(max)))
    #   = (relu(avg @ W1^T) + relu(max @ W1^T)) @ W2^T   (fc2 is linear)
    h = (jnp.maximum(jnp.dot(avg, w1t, preferred_element_type=jnp.float32), 0.0)
         + jnp.maximum(jnp.dot(mx, w1t, preferred_element_type=jnp.float32), 0.0))
    out = jnp.dot(h, w2t, preferred_element_type=jnp.float32)   # (Bt, C)

    o_ref[...] = jax.nn.sigmoid(out).astype(o_ref.dtype)


def channel_attention(x, fc1_weight, fc2_weight, *, batch_tile=None):
    """x: (B, C, H, W); fc1_weight: (Cr, C, 1, 1); fc2_weight: (C, Cr, 1, 1).

    Returns (B, C, 1, 1), matching ChannelAttention.forward.
    """
    B, C, H, W = x.shape
    Cr = fc1_weight.shape[0]
    assert fc1_weight.shape[:2] == (Cr, C), fc1_weight.shape
    assert fc2_weight.shape[:2] == (C, Cr), fc2_weight.shape

    # 1x1 convs are channel matmuls; pre-transpose wrapper-side (no in-kernel XLU).
    w1_t = fc1_weight.reshape(Cr, C).T.astype(jnp.float32)   # (C, Cr)
    w2_t = fc2_weight.reshape(C, Cr).T.astype(jnp.float32)   # (Cr, C)

    # Flatten spatial dims so the reduction axis is lane-dense (H*W >= 128 ideally).
    HW = H * W
    x2 = x.reshape(B, C, HW)

    if batch_tile is None:
        # Cap the per-step input block at ~4 MiB so double-buffered DMA fits
        # comfortably under every generation's default scoped-VMEM limit
        # (16 MiB on v5e, 32 MiB on v6e/v7x).
        bytes_per_img = C * HW * x.dtype.itemsize
        batch_tile = max(1, min(B, (4 << 20) // max(bytes_per_img, 1)))
    Bt = int(batch_tile)

    grid = (pl.cdiv(B, Bt),)

    out2 = pl.pallas_call(
        _channel_attention_kernel,
        out_shape=jax.ShapeDtypeStruct((B, C), x.dtype),
        grid=grid,
        in_specs=[
            pl.BlockSpec((Bt, C, HW), lambda b: (b, 0, 0)),   # batch tile of images
            pl.BlockSpec((C, Cr), lambda b: (0, 0)),          # fc1^T (resident)
            pl.BlockSpec((Cr, C), lambda b: (0, 0)),          # fc2^T (resident)
        ],
        out_specs=pl.BlockSpec((Bt, C), lambda b: (b, 0)),
        compiler_params=pltpu.CompilerParams(
            dimension_semantics=("parallel",),
        ),
    )(x2, w1_t, w2_t)

    return out2.reshape(B, C, 1, 1)


def _reference(x, fc1_weight, fc2_weight):
    """Pure-JAX reference matching the PyTorch forward pass."""
    B, C, H, W = x.shape
    Cr = fc1_weight.shape[0]
    W1 = fc1_weight.reshape(Cr, C)     # (Cr, C)
    W2 = fc2_weight.reshape(C, Cr)     # (C, Cr)
    avg = jnp.mean(x, axis=(2, 3))     # (B, C)  == AdaptiveAvgPool2d(1)
    mx = jnp.max(x, axis=(2, 3))       # (B, C)  == AdaptiveMaxPool2d(1)

    def mlp(v):
        return jnp.maximum(v @ W1.T, 0.0) @ W2.T

    out = mlp(avg) + mlp(mx)
    return jax.nn.sigmoid(out).reshape(B, C, 1, 1)


if __name__ == "__main__":
    key = jax.random.PRNGKey(0)
    kx, k1, k2 = jax.random.split(key, 3)

    # Shapes consistent with ChannelAttention defaults: in_planes=64, ratio=16.
    B, C, H, W = 2, 64, 16, 16
    ratio = 16
    Cr = C // ratio

    x = jax.random.normal(kx, (B, C, H, W), dtype=jnp.float32)
    fc1_weight = 0.1 * jax.random.normal(k1, (Cr, C, 1, 1), dtype=jnp.float32)
    fc2_weight = 0.1 * jax.random.normal(k2, (C, Cr, 1, 1), dtype=jnp.float32)

    out = channel_attention(x, fc1_weight, fc2_weight)
    out = jax.block_until_ready(out)

    ref = jax.block_until_ready(_reference(x, fc1_weight, fc2_weight))
    assert out.shape == (B, C, 1, 1), out.shape
    assert jnp.allclose(out, ref, atol=1e-4, rtol=1e-4), (
        float(jnp.max(jnp.abs(out - ref))))

    print("KERNEL_OK")
</pallas_src>

<mosaic_0001>
module attributes {stable_mosaic.version = 11 : i64} {
  func.func @_channel_attention_kernel(%arg0: i32, %arg1: memref<2x64x256xf32, #tpu.memory_space<vmem>>, %arg2: memref<64x4xf32, #tpu.memory_space<vmem>>, %arg3: memref<4x64xf32, #tpu.memory_space<vmem>>, %arg4: memref<2x64xf32, #tpu.memory_space<vmem>>) attributes {dimension_semantics = [#tpu.dimension_semantics<parallel>], iteration_bounds = array<i64: 1>, scalar_prefetch = 0 : i64, scratch_operands = 0 : i64, tpu.core_type = #tpu.core_type<tc>, window_params = [{transform_indices = @transform_0, window_bounds = array<i64: 2, 64, 256>}, {pipeline_mode = #tpu.pipeline_mode<synchronous>, transform_indices = @transform_1, window_bounds = array<i64: 64, 4>}, {pipeline_mode = #tpu.pipeline_mode<synchronous>, transform_indices = @transform_2, window_bounds = array<i64: 4, 64>}, {transform_indices = @transform_3, window_bounds = array<i64: 2, 64>}]} {
    %c0 = arith.constant 0 : index
    %c0_0 = arith.constant 0 : index
    %c0_1 = arith.constant 0 : index
    %0 = vector.load %arg1[%c0, %c0_0, %c0_1] : memref<2x64x256xf32, #tpu.memory_space<vmem>>, vector<2x64x256xf32>
    %cst = arith.constant dense<0.000000e+00> : vector<2x64xf32>
    %1 = vector.multi_reduction <add>, %0, %cst [2] : vector<2x64x256xf32> to vector<2x64xf32>
    %cst_2 = arith.constant 2.560000e+02 : f32
    %2 = vector.broadcast %cst_2 : f32 to vector<2x64xf32>
    %3 = arith.divf %1, %2 : vector<2x64xf32>
    %cst_3 = arith.constant dense<0xFF800000> : vector<2x64xf32>
    %4 = vector.multi_reduction <maximumf>, %0, %cst_3 [2] : vector<2x64x256xf32> to vector<2x64xf32>
    %c0_4 = arith.constant 0 : index
    %c0_5 = arith.constant 0 : index
    %5 = vector.load %arg2[%c0_4, %c0_5] : memref<64x4xf32, #tpu.memory_space<vmem>>, vector<64x4xf32>
    %c0_6 = arith.constant 0 : index
    %c0_7 = arith.constant 0 : index
    %6 = vector.load %arg3[%c0_6, %c0_7] : memref<4x64xf32, #tpu.memory_space<vmem>>, vector<4x64xf32>
    %cst_8 = arith.constant dense<0.000000e+00> : vector<2x4xf32>
    %7 = tpu.matmul %3, %5, %cst_8 {dimension_numbers = #tpu.dot_dimension_numbers<[1], [0], [0], [1], [0, 0, 1, 1], [], []>} : vector<2x64xf32>, vector<64x4xf32>, vector<2x4xf32> -> vector<2x4xf32>
    %cst_9 = arith.constant 0.000000e+00 : f32
    %8 = vector.broadcast %cst_9 : f32 to vector<2x4xf32>
    %9 = arith.maximumf %7, %8 : vector<2x4xf32>
    %cst_10 = arith.constant dense<0.000000e+00> : vector<2x4xf32>
    %10 = tpu.matmul %4, %5, %cst_10 {dimension_numbers = #tpu.dot_dimension_numbers<[1], [0], [0], [1], [0, 0, 1, 1], [], []>} : vector<2x64xf32>, vector<64x4xf32>, vector<2x4xf32> -> vector<2x4xf32>
    %cst_11 = arith.constant 0.000000e+00 : f32
    %11 = vector.broadcast %cst_11 : f32 to vector<2x4xf32>
    %12 = arith.maximumf %10, %11 : vector<2x4xf32>
    %13 = arith.addf %9, %12 : vector<2x4xf32>
    %cst_12 = arith.constant dense<0.000000e+00> : vector<2x64xf32>
    %14 = tpu.matmul %13, %6, %cst_12 {dimension_numbers = #tpu.dot_dimension_numbers<[1], [0], [0], [1], [0, 0, 1, 1], [], []>} : vector<2x4xf32>, vector<4x64xf32>, vector<2x64xf32> -> vector<2x64xf32>
    %15 = arith.negf %14 : vector<2x64xf32>
    %16 = math.exp %15 : vector<2x64xf32>
    %cst_13 = arith.constant 1.000000e+00 : f32
    %17 = vector.broadcast %cst_13 : f32 to vector<2x64xf32>
    %18 = arith.addf %17, %16 : vector<2x64xf32>
    %19 = arith.divf %17, %18 : vector<2x64xf32>
    %c0_14 = arith.constant 0 : index
    %c0_15 = arith.constant 0 : index
    %20 = vector.load %arg4[%c0_14, %c0_15] : memref<2x64xf32, #tpu.memory_space<vmem>>, vector<2x64xf32>
    tpu.vector_store %arg4[%c0_14, %c0_15], %19 {strides = array<i32>} : memref<2x64xf32, #tpu.memory_space<vmem>>, vector<2x64xf32>,
    return
  }
  func.func @transform_0(%arg0: i32) -> (i32, i32, i32) {
    %c0_i32 = arith.constant 0 : i32
    %c0_i32_0 = arith.constant 0 : i32
    %c0_i32_1 = arith.constant 0 : i32
    return %arg0, %c0_i32, %c0_i32_0 : i32, i32, i32
  }
  func.func @transform_1(%arg0: i32) -> (i32, i32) {
    %c0_i32 = arith.constant 0 : i32
    %c0_i32_0 = arith.constant 0 : i32
    %c0_i32_1 = arith.constant 0 : i32
    return %c0_i32, %c0_i32_0 : i32, i32
  }
  func.func @transform_2(%arg0: i32) -> (i32, i32) {
    %c0_i32 = arith.constant 0 : i32
    %c0_i32_0 = arith.constant 0 : i32
    %c0_i32_1 = arith.constant 0 : i32
    return %c0_i32, %c0_i32_0 : i32, i32
  }
  func.func @transform_3(%arg0: i32) -> (i32, i32) {
    %c0_i32 = arith.constant 0 : i32
    %c0_i32_0 = arith.constant 0 : i32
    return %arg0, %c0_i32 : i32, i32
  }
}

</mosaic_0001>

<llo_original>
// kernel: tpu_custom_call.1
$region0: #{tpu_custom_call.1}
  #allocation0 [shape = 'u32[]', space=smem, size = 0x4, offset = 0x4, fixed_abs, tag = 'smem constant byte address 0x4 - core index']
  #allocation1 [shape = 'u32[144,128]{1,0:T(1,128)}', space=vmem, size = 0x12000, scoped, tag = 'internal scratch']
  %s0 = inlined_call_operand.hbm [shape: f32[2,64,256], index: 0, kind: input, shape index: {}]
  %s1 = inlined_call_operand.vmem [shape: f32[64,4], index: 1, kind: input, shape index: {}]
  %s2 = inlined_call_operand.vmem [shape: f32[4,64], index: 2, kind: input, shape index: {}]
  %s3 = inlined_call_operand.hbm [shape: f32[2,64], index: 3, kind: output, shape index: {}]
  %s4 = sld [smem:[#allocation0]]
  $region26: #{tpu_custom_call.1} parent=0
    _
  %s6 = ssub.s32 1, %s4
  %s7 = scalar_select 0, %s6, %s4
  $region1: #{tpu_custom_call.1} parent=0
    #allocation2 [shape = 'u8[131072]{0}', space=vmem, size = 0x20000, scoped, tag = 'input window, operand 0, single buffered']
    #allocation3 [shape = 's32[1]{0}', space=sflag, size = 0x4, scoped, tag = 'scoped memory for tpu_custom_call.1']
    #allocation4 [shape = 's32[1]{0}', space=sflag, size = 0x4, scoped, tag = 'scoped memory for tpu_custom_call.1']
    #allocation5 [shape = 'u8[1024]{0}', space=vmem, size = 0x400, scoped, tag = 'output window, operand 0, single buffered']
    %8 = vsyncpa [#allocation3], 0
    %9 = vsyncpa [#allocation4], 0
    // Predicated region
    $region2: #{tpu_custom_call.1} parent=1 // pred_check
      _
    $region3: #{tpu_custom_call.1} parent=1 // pred_check_branch
      %11 = sbr.rel (0) target = $region5
    $region4: #{tpu_custom_call.1} parent=1 // pred_region
      %s13 = ssub.s32 4096, 4096
      %14 = vsyncadd [#allocation3], %s13
      %s15 = sshll.u32 [#allocation2], 4
      %s16 = int_to_ptr.vmem [resolvable:$true] %s15
      %21 = dma.hbm_to_vmem [thread:$0]  %s0, 4096, %s16, [#allocation3], 256, 256, 16
    $region5: #{tpu_custom_call.1} parent=1 // pred_fallthru
      _
    // Predicated region
    $region6: #{tpu_custom_call.1} parent=1 // pred_check
      _
    $region7: #{tpu_custom_call.1} parent=1 // pred_check_branch
      %23 = sbr.rel (0) target = $region9
    $region8: #{tpu_custom_call.1} parent=1 // pred_region
      _
    $region9: #{tpu_custom_call.1} parent=1 // pred_fallthru
      _
    // Predicated region
    $region10: #{tpu_custom_call.1} parent=1 // pred_check
      _
    $region11: #{tpu_custom_call.1} parent=1 // pred_check_branch
      %25 = sbr.rel (0) target = $region13
    $region12: #{tpu_custom_call.1} parent=1 // pred_region
      _
    $region13: #{tpu_custom_call.1} parent=1 // pred_fallthru
      _
    // Predicated region
    $region14: #{tpu_custom_call.1} parent=1 // pred_check
      _
    $region15: #{tpu_custom_call.1} parent=1 // pred_check_branch
      %27 = sbr.rel (0) target = $region17
    $region16: #{tpu_custom_call.1} parent=1 // pred_region
      %28 = dma.done [#allocation3], 4096
    $region17: #{tpu_custom_call.1} parent=1 // pred_fallthru
      _
    %v29 = vld [vmem:[#allocation2] sm:$0xff]
    %v30 = vld [vmem:[#allocation2 + $0x8] sm:$0xff]
    %v31 = vld [vmem:[#allocation2 + $0x10] sm:$0xff]
    %v32 = vld [vmem:[#allocation2 + $0x18] sm:$0xff]
    %v33 = vld [vmem:[#allocation2 + $0x20] sm:$0xff]
    %v34 = vld [vmem:[#allocation2 + $0x28] sm:$0xff]
    %v35 = vld [vmem:[#allocation2 + $0x30] sm:$0xff]
    %v36 = vld [vmem:[#allocation2 + $0x38] sm:$0xff]
    %v37 = vld [vmem:[#allocation2 + $0x40] sm:$0xff]
    %v38 = vld [vmem:[#allocation2 + $0x48] sm:$0xff]
    %v39 = vld [vmem:[#allocation2 + $0x50] sm:$0xff]
    %v40 = vld [vmem:[#allocation2 + $0x58] sm:$0xff]
    %v41 = vld [vmem:[#allocation2 + $0x60] sm:$0xff]
    %v42 = vld [vmem:[#allocation2 + $0x68] sm:$0xff]
    %v43 = vld [vmem:[#allocation2 + $0x70] sm:$0xff]
    %v44 = vld [vmem:[#allocation2 + $0x78] sm:$0xff]
    %v45 = vld [vmem:[#allocation2 + $0x80] sm:$0xff]
    %v46 = vld [vmem:[#allocation2 + $0x88] sm:$0xff]
    %v47 = vld [vmem:[#allocation2 + $0x90] sm:$0xff]
    %v48 = vld [vmem:[#allocation2 + $0x98] sm:$0xff]
    %v49 = vld [vmem:[#allocation2 + $0xa0] sm:$0xff]
    %v50 = vld [vmem:[#allocation2 + $0xa8] sm:$0xff]
    %v51 = vld [vmem:[#allocation2 + $0xb0] sm:$0xff]
    %v52 = vld [vmem:[#allocation2 + $0xb8] sm:$0xff]
    %v53 = vld [vmem:[#allocation2 + $0xc0] sm:$0xff]
    %v54 = vld [vmem:[#allocation2 + $0xc8] sm:$0xff]
    %v55 = vld [vmem:[#allocation2 + $0xd0] sm:$0xff]
    %v56 = vld [vmem:[#allocation2 + $0xd8] sm:$0xff]
    %v57 = vld [vmem:[#allocation2 + $0xe0] sm:$0xff]
    %v58 = vld [vmem:[#allocation2 + $0xe8] sm:$0xff]
    %v59 = vld [vmem:[#allocation2 + $0xf0] sm:$0xff]
    %v60 = vld [vmem:[#allocation2 + $0xf8] sm:$0xff]
    %v61 = vadd.f32 %v29, %v30
    %62 = vadd.xlane.f32.xlu0 %v61
    %v63 = vpop.xlane.xlu0 %62
    %v64 = vadd.f32 %v31, %v32
    %65 = vadd.xlane.f32.xlu0 %v64
    %v66 = vpop.xlane.xlu0 %65
    %v67 = vadd.f32 %v33, %v34
    %68 = vadd.xlane.f32.xlu0 %v67
    %v69 = vpop.xlane.xlu0 %68
    %v70 = vadd.f32 %v35, %v36
    %71 = vadd.xlane.f32.xlu0 %v70
    %v72 = vpop.xlane.xlu0 %71
    %v73 = vadd.f32 %v37, %v38
    %74 = vadd.xlane.f32.xlu0 %v73
    %v75 = vpop.xlane.xlu0 %74
    %v76 = vadd.f32 %v39, %v40
    %77 = vadd.xlane.f32.xlu0 %v76
    %v78 = vpop.xlane.xlu0 %77
    %v79 = vadd.f32 %v41, %v42
    %80 = vadd.xlane.f32.xlu0 %v79
    %v81 = vpop.xlane.xlu0 %80
    %v82 = vadd.f32 %v43, %v44
    %83 = vadd.xlane.f32.xlu0 %v82
    %v84 = vpop.xlane.xlu0 %83
    %v85 = vadd.f32 %v45, %v46
    %86 = vadd.xlane.f32.xlu0 %v85
    %v87 = vpop.xlane.xlu0 %86
    %v88 = vadd.f32 %v47, %v48
    %89 = vadd.xlane.f32.xlu0 %v88
    %v90 = vpop.xlane.xlu0 %89
    %v91 = vadd.f32 %v49, %v50
    %92 = vadd.xlane.f32.xlu0 %v91
    %v93 = vpop.xlane.xlu0 %92
    %v94 = vadd.f32 %v51, %v52
    %95 = vadd.xlane.f32.xlu0 %v94
    %v96 = vpop.xlane.xlu0 %95
    %v97 = vadd.f32 %v53, %v54
    %98 = vadd.xlane.f32.xlu0 %v97
    %v99 = vpop.xlane.xlu0 %98
    %v100 = vadd.f32 %v55, %v56
    %101 = vadd.xlane.f32.xlu0 %v100
    %v102 = vpop.xlane.xlu0 %101
    %v103 = vadd.f32 %v57, %v58
    %104 = vadd.xlane.f32.xlu0 %v103
    %v105 = vpop.xlane.xlu0 %104
    %v106 = vadd.f32 %v59, %v60
    %107 = vadd.xlane.f32.xlu0 %v106
    %v108 = vpop.xlane.xlu0 %107
    %v109 = vrcp.pop 256.0
    %v110 = vmul.f32 %v63, %v109
    %v111 = vmul.f32 %v66, %v109
    %v112 = vmul.f32 %v69, %v109
    %v113 = vmul.f32 %v72, %v109
    %v114 = vmul.f32 %v75, %v109
    %v115 = vmul.f32 %v78, %v109
    %v116 = vmul.f32 %v81, %v109
    %v117 = vmul.f32 %v84, %v109
    %v118 = vmul.f32 %v87, %v109
    %v119 = vmul.f32 %v90, %v109
    %v120 = vmul.f32 %v93, %v109
    %v121 = vmul.f32 %v96, %v109
    %v122 = vmul.f32 %v99, %v109
    %v123 = vmul.f32 %v102, %v109
    %v124 = vmul.f32 %v105, %v109
    %v125 = vmul.f32 %v108, %v109
    %v126 = vmax.f32 %v29, %v30
    %127 = vmax.xlane.f32.xlu0 %v126
    %v128 = vpop.xlane.xlu0 %127
    %v129 = vmax.f32 %v31, %v32
    %130 = vmax.xlane.f32.xlu0 %v129
    %v131 = vpop.xlane.xlu0 %130
    %v132 = vmax.f32 %v33, %v34
    %133 = vmax.xlane.f32.xlu0 %v132
    %v134 = vpop.xlane.xlu0 %133
    %v135 = vmax.f32 %v35, %v36
    %136 = vmax.xlane.f32.xlu0 %v135
    %v137 = vpop.xlane.xlu0 %136
    %v138 = vmax.f32 %v37, %v38
    %139 = vmax.xlane.f32.xlu0 %v138
    %v140 = vpop.xlane.xlu0 %139
    %v141 = vmax.f32 %v39, %v40
    %142 = vmax.xlane.f32.xlu0 %v141
    %v143 = vpop.xlane.xlu0 %142
    %v144 = vmax.f32 %v41, %v42
    %145 = vmax.xlane.f32.xlu0 %v144
    %v146 = vpop.xlane.xlu0 %145
    %v147 = vmax.f32 %v43, %v44
    %148 = vmax.xlane.f32.xlu0 %v147
    %v149 = vpop.xlane.xlu0 %148
    %v150 = vmax.f32 %v45, %v46
    %151 = vmax.xlane.f32.xlu0 %v150
    %v152 = vpop.xlane.xlu0 %151
    %v153 = vmax.f32 %v47, %v48
    %154 = vmax.xlane.f32.xlu0 %v153
    %v155 = vpop.xlane.xlu0 %154
    %v156 = vmax.f32 %v49, %v50
    %157 = vmax.xlane.f32.xlu0 %v156
    %v158 = vpop.xlane.xlu0 %157
    %v159 = vmax.f32 %v51, %v52
    %160 = vmax.xlane.f32.xlu0 %v159
    %v161 = vpop.xlane.xlu0 %160
    %v162 = vmax.f32 %v53, %v54
    %163 = vmax.xlane.f32.xlu0 %v162
    %v164 = vpop.xlane.xlu0 %163
    %v165 = vmax.f32 %v55, %v56
    %166 = vmax.xlane.f32.xlu0 %v165
    %v167 = vpop.xlane.xlu0 %166
    %v168 = vmax.f32 %v57, %v58
    %169 = vmax.xlane.f32.xlu0 %v168
    %v170 = vpop.xlane.xlu0 %169
    %v171 = vmax.f32 %v59, %v60
    %172 = vmax.xlane.f32.xlu0 %v171
    %v173 = vpop.xlane.xlu0 %172
    %v174 = vld [vmem:[%s1] sm:$0xff]
    %v175 = vld [vmem:[%s1 + $0x8] sm:$0xff]
    %v176 = vld [vmem:[%s1 + $0x10] sm:$0xff]
    %v177 = vld [vmem:[%s1 + $0x18] sm:$0xff]
    %v178 = vld [vmem:[%s1 + $0x20] sm:$0xff]
    %v179 = vld [vmem:[%s1 + $0x28] sm:$0xff]
    %v180 = vld [vmem:[%s1 + $0x30] sm:$0xff]
    %v181 = vld [vmem:[%s1 + $0x38] sm:$0xff]
    %v182 = vld [vmem:[%s2] sm:$0xf]
    %v199 = vlaneseq
    %v200 = vand.u32 %v199, 127
    %v201 = vlaneseq
    %v202 = vshrl.u32 %v201, 7
    %v203 = vsub.s32 %v200, %v202
    %v204 = vrot.slane %v110, %v203
    %v205 = vadd.s32 %v200, 4294967288
    %v206 = vlaneseq
    %v207 = vshrl.u32 %v206, 7
    %v208 = vsub.s32 %v205, %v207
    %v209 = vrot.slane %v111, %v208
    %vm210 = vcmask 130112
    %v211 = vsel %vm210, %v209, %v204
    %v212 = vadd.s32 %v200, 4294967280
    %v213 = vlaneseq
    %v214 = vshrl.u32 %v213, 7
    %v215 = vsub.s32 %v212, %v214
    %v216 = vrot.slane %v112, %v215
    %vm217 = vcmask 195712
    %v218 = vsel %vm217, %v216, %v211
    %v219 = vadd.s32 %v200, 4294967272
    %v220 = vlaneseq
    %v221 = vshrl.u32 %v220, 7
    %v222 = vsub.s32 %v219, %v221
    %v223 = vrot.slane %v113, %v222
    %vm224 = vcmask 261312
    %v225 = vsel %vm224, %v223, %v218
    %v226 = vadd.s32 %v200, 4294967264
    %v227 = vlaneseq
    %v228 = vshrl.u32 %v227, 7
    %v229 = vsub.s32 %v226, %v228
    %v230 = vrot.slane %v114, %v229
    %vm231 = vcmask 326912
    %v232 = vsel %vm231, %v230, %v225
    %v233 = vadd.s32 %v200, 4294967256
    %v234 = vlaneseq
    %v235 = vshrl.u32 %v234, 7
    %v236 = vsub.s32 %v233, %v235
    %v237 = vrot.slane %v115, %v236
    %vm238 = vcmask 392512
    %v239 = vsel %vm238, %v237, %v232
    %v240 = vadd.s32 %v200, 4294967248
    %v241 = vlaneseq
    %v242 = vshrl.u32 %v241, 7
    %v243 = vsub.s32 %v240, %v242
    %v244 = vrot.slane %v116, %v243
    %vm245 = vcmask 458112
    %v246 = vsel %vm245, %v244, %v239
    %v247 = vadd.s32 %v200, 4294967240
    %v248 = vlaneseq
    %v249 = vshrl.u32 %v248, 7
    %v250 = vsub.s32 %v247, %v249
    %v251 = vrot.slane %v117, %v250
    %vm252 = vcmask 523712
    %v253 = vsel %vm252, %v251, %v246
    %v254 = vlaneseq
    %v255 = vshrl.u32 %v254, 7
    %v256 = vsub.s32 %v200, %v255
    %v257 = vrot.slane %v118, %v256
    %v258 = vlaneseq
    %v259 = vshrl.u32 %v258, 7
    %v260 = vsub.s32 %v205, %v259
    %v261 = vrot.slane %v119, %v260
    %v262 = vsel %vm210, %v261, %v257
    %v263 = vlaneseq
    %v264 = vshrl.u32 %v263, 7
    %v265 = vsub.s32 %v212, %v264
    %v266 = vrot.slane %v120, %v265
    %v267 = vsel %vm217, %v266, %v262
    %v268 = vlaneseq
    %v269 = vshrl.u32 %v268, 7
    %v270 = vsub.s32 %v219, %v269
    %v271 = vrot.slane %v121, %v270
    %v272 = vsel %vm224, %v271, %v267
    %v273 = vlaneseq
    %v274 = vshrl.u32 %v273, 7
    %v275 = vsub.s32 %v226, %v274
    %v276 = vrot.slane %v122, %v275
    %v277 = vsel %vm231, %v276, %v272
    %v278 = vlaneseq
    %v279 = vshrl.u32 %v278, 7
    %v280 = vsub.s32 %v233, %v279
    %v281 = vrot.slane %v123, %v280
    %v282 = vsel %vm238, %v281, %v277
    %v283 = vlaneseq
    %v284 = vshrl.u32 %v283, 7
    %v285 = vsub.s32 %v240, %v284
    %v286 = vrot.slane %v124, %v285
    %v287 = vsel %vm245, %v286, %v282
    %v288 = vlaneseq
    %v289 = vshrl.u32 %v288, 7
    %v290 = vsub.s32 %v247, %v289
    %v291 = vrot.slane %v125, %v290
    %v292 = vsel %vm252, %v291, %v287
    %vm293 = vcmask 1041409
    %v294 = vsel %vm293, %v292, %v253
    %vm295 = vcmask 523264
    %v296 = vsel %vm295, %v294, 0
    %298 = vmatprep.subr.mxu0 0.0
    %299 = vmatpush1.msra.mxu0 %v174
    %300 = vmatprep.subr.mxu0 0.0
    %301 = vmatpush1.msra.mxu0 %v175
    %302 = vmatprep.subr.mxu0 0.0
    %303 = vmatpush1.msra.mxu0 %v176
    %304 = vmatprep.subr.mxu0 0.0
    %305 = vmatpush1.msra.mxu0 %v177
    %306 = vmatprep.subr.mxu0 0.0
    %307 = vmatpush1.msra.mxu0 %v178
    %308 = vmatprep.subr.mxu0 0.0
    %309 = vmatpush1.msra.mxu0 %v179
    %310 = vmatprep.subr.mxu0 0.0
    %311 = vmatpush1.msra.mxu0 %v180
    %312 = vmatprep.subr.mxu0 0.0
    %313 = vmatpush1.msra.mxu0 %v181
    %314 = vmatprep.subr.mxu0 0.0
    %315 = vmatpush1.msra.mxu0 0.0
    %316 = vmatprep.subr.mxu0 0.0
    %317 = vmatpush1.msra.mxu0 0.0
    %318 = vmatprep.subr.mxu0 0.0
    %319 = vmatpush1.msra.mxu0 0.0
    %320 = vmatprep.subr.mxu0 0.0
    %321 = vmatpush1.msra.mxu0 0.0
    %322 = vmatprep.subr.mxu0 0.0
    %323 = vmatpush1.msra.mxu0 0.0
    %324 = vmatprep.subr.mxu0 0.0
    %325 = vmatpush1.msra.mxu0 0.0
    %326 = vmatprep.subr.mxu0 0.0
    %327 = vmatpush1.msra.mxu0 0.0
    %328 = vmatprep.subr.mxu0 0.0
    %329 = vmatpush1.msra.mxu0 0.0
    %330 = vmatprep.subr.mxu0 0.0
    %331 = vmatpush1.msra.mxu0 0.0
    %332 = vmatprep.subr.mxu0 0.0
    %333 = vmatpush1.msra.mxu0 0.0
    %334 = vmatprep.subr.mxu0 0.0
    %335 = vmatpush1.msra.mxu0 0.0
    %336 = vmatprep.subr.mxu0 0.0
    %337 = vmatpush1.msra.mxu0 0.0
    %338 = vmatprep.subr.mxu0 0.0
    %339 = vmatpush1.msra.mxu0 0.0
    %340 = vmatprep.subr.mxu0 0.0
    %341 = vmatpush1.msra.mxu0 0.0
    %342 = vmatprep.subr.mxu0 0.0
    %343 = vmatpush1.msra.mxu0 0.0
    %344 = vmatprep.subr.mxu0 0.0
    %345 = vmatpush1.msra.mxu0 0.0
    %346 = vmatprep.subr.mxu0 0.0
    %347 = vmatpush1.msra.mxu0 0.0
    %348 = vmatprep.subr.mxu0 0.0
    %349 = vmatpush1.msra.mxu0 0.0
    %350 = vmatprep.subr.mxu0 0.0
    %351 = vmatpush1.msra.mxu0 0.0
    %352 = vmatprep.subr.mxu0 0.0
    %353 = vmatpush1.msra.mxu0 0.0
    %354 = vmatprep.subr.mxu0 0.0
    %355 = vmatpush1.msra.mxu0 0.0
    %356 = vmatprep.subr.mxu0 0.0
    %357 = vmatpush1.msra.mxu0 0.0
    %358 = vmatprep.subr.mxu0 0.0
    %359 = vmatpush1.msra.mxu0 0.0
    %360 = vmatprep.subr.mxu0 0.0
    %361 = vmatpush1.msra.mxu0 0.0
    %362 = vmatprep.mubr.f32.mxu0 0.0
    %363 = vmatmul.mubr.f32.gmra.mrb[0].mxu0 %v296
    %v364 = vpop.f32.mrb[0].mxu0
    %v365 = vadd.f32 0.0, %v364
    %v366 = vpop.f32.mrb[0].mxu0
    %367 = vdwg.mxu0
    %v368 = vmax.f32 %v365, 0.0
    %v385 = vlaneseq
    %v386 = vshrl.u32 %v385, 7
    %v387 = vsub.s32 %v200, %v386
    %v388 = vrot.slane %v128, %v387
    %v389 = vlaneseq
    %v390 = vshrl.u32 %v389, 7
    %v391 = vsub.s32 %v205, %v390
    %v392 = vrot.slane %v131, %v391
    %v393 = vsel %vm210, %v392, %v388
    %v394 = vlaneseq
    %v395 = vshrl.u32 %v394, 7
    %v396 = vsub.s32 %v212, %v395
    %v397 = vrot.slane %v134, %v396
    %v398 = vsel %vm217, %v397, %v393
    %v399 = vlaneseq
    %v400 = vshrl.u32 %v399, 7
    %v401 = vsub.s32 %v219, %v400
    %v402 = vrot.slane %v137, %v401
    %v403 = vsel %vm224, %v402, %v398
    %v404 = vlaneseq
    %v405 = vshrl.u32 %v404, 7
    %v406 = vsub.s32 %v226, %v405
    %v407 = vrot.slane %v140, %v406
    %v408 = vsel %vm231, %v407, %v403
    %v409 = vlaneseq
    %v410 = vshrl.u32 %v409, 7
    %v411 = vsub.s32 %v233, %v410
    %v412 = vrot.slane %v143, %v411
    %v413 = vsel %vm238, %v412, %v408
    %v414 = vlaneseq
    %v415 = vshrl.u32 %v414, 7
    %v416 = vsub.s32 %v240, %v415
    %v417 = vrot.slane %v146, %v416
    %v418 = vsel %vm245, %v417, %v413
    %v419 = vlaneseq
    %v420 = vshrl.u32 %v419, 7
    %v421 = vsub.s32 %v247, %v420
    %v422 = vrot.slane %v149, %v421
    %v423 = vsel %vm252, %v422, %v418
    %v424 = vlaneseq
    %v425 = vshrl.u32 %v424, 7
    %v426 = vsub.s32 %v200, %v425
    %v427 = vrot.slane %v152, %v426
    %v428 = vlaneseq
    %v429 = vshrl.u32 %v428, 7
    %v430 = vsub.s32 %v205, %v429
    %v431 = vrot.slane %v155, %v430
    %v432 = vsel %vm210, %v431, %v427
    %v433 = vlaneseq
    %v434 = vshrl.u32 %v433, 7
    %v435 = vsub.s32 %v212, %v434
    %v436 = vrot.slane %v158, %v435
    %v437 = vsel %vm217, %v436, %v432
    %v438 = vlaneseq
    %v439 = vshrl.u32 %v438, 7
    %v440 = vsub.s32 %v219, %v439
    %v441 = vrot.slane %v161, %v440
    %v442 = vsel %vm224, %v441, %v437
    %v443 = vlaneseq
    %v444 = vshrl.u32 %v443, 7
    %v445 = vsub.s32 %v226, %v444
    %v446 = vrot.slane %v164, %v445
    %v447 = vsel %vm231, %v446, %v442
    %v448 = vlaneseq
    %v449 = vshrl.u32 %v448, 7
    %v450 = vsub.s32 %v233, %v449
    %v451 = vrot.slane %v167, %v450
    %v452 = vsel %vm238, %v451, %v447
    %v453 = vlaneseq
    %v454 = vshrl.u32 %v453, 7
    %v455 = vsub.s32 %v240, %v454
    %v456 = vrot.slane %v170, %v455
    %v457 = vsel %vm245, %v456, %v452
    %v458 = vlaneseq
    %v459 = vshrl.u32 %v458, 7
    %v460 = vsub.s32 %v247, %v459
    %v461 = vrot.slane %v173, %v460
    %v462 = vsel %vm252, %v461, %v457
    %v463 = vsel %vm293, %v462, %v423
    %v464 = vsel %vm295, %v463, 0
    %466 = vmatprep.subr.mxu0 0.0
    %467 = vmatpush1.msra.mxu0 %v174
    %468 = vmatprep.subr.mxu0 0.0
    %469 = vmatpush1.msra.mxu0 %v175
    %470 = vmatprep.subr.mxu0 0.0
    %471 = vmatpush1.msra.mxu0 %v176
    %472 = vmatprep.subr.mxu0 0.0
    %473 = vmatpush1.msra.mxu0 %v177
    %474 = vmatprep.subr.mxu0 0.0
    %475 = vmatpush1.msra.mxu0 %v178
    %476 = vmatprep.subr.mxu0 0.0
    %477 = vmatpush1.msra.mxu0 %v179
    %478 = vmatprep.subr.mxu0 0.0
    %479 = vmatpush1.msra.mxu0 %v180
    %480 = vmatprep.subr.mxu0 0.0
    %481 = vmatpush1.msra.mxu0 %v181
    %482 = vmatprep.subr.mxu0 0.0
    %483 = vmatpush1.msra.mxu0 0.0
    %484 = vmatprep.subr.mxu0 0.0
    %485 = vmatpush1.msra.mxu0 0.0
    %486 = vmatprep.subr.mxu0 0.0
    %487 = vmatpush1.msra.mxu0 0.0
    %488 = vmatprep.subr.mxu0 0.0
    %489 = vmatpush1.msra.mxu0 0.0
    %490 = vmatprep.subr.mxu0 0.0
    %491 = vmatpush1.msra.mxu0 0.0
    %492 = vmatprep.subr.mxu0 0.0
    %493 = vmatpush1.msra.mxu0 0.0
    %494 = vmatprep.subr.mxu0 0.0
    %495 = vmatpush1.msra.mxu0 0.0
    %496 = vmatprep.subr.mxu0 0.0
    %497 = vmatpush1.msra.mxu0 0.0
    %498 = vmatprep.subr.mxu0 0.0
    %499 = vmatpush1.msra.mxu0 0.0
    %500 = vmatprep.subr.mxu0 0.0
    %501 = vmatpush1.msra.mxu0 0.0
    %502 = vmatprep.subr.mxu0 0.0
    %503 = vmatpush1.msra.mxu0 0.0
    %504 = vmatprep.subr.mxu0 0.0
    %505 = vmatpush1.msra.mxu0 0.0
    %506 = vmatprep.subr.mxu0 0.0
    %507 = vmatpush1.msra.mxu0 0.0
    %508 = vmatprep.subr.mxu0 0.0
    %509 = vmatpush1.msra.mxu0 0.0
    %510 = vmatprep.subr.mxu0 0.0
    %511 = vmatpush1.msra.mxu0 0.0
    %512 = vmatprep.subr.mxu0 0.0
    %513 = vmatpush1.msra.mxu0 0.0
    %514 = vmatprep.subr.mxu0 0.0
    %515 = vmatpush1.msra.mxu0 0.0
    %516 = vmatprep.subr.mxu0 0.0
    %517 = vmatpush1.msra.mxu0 0.0
    %518 = vmatprep.subr.mxu0 0.0
    %519 = vmatpush1.msra.mxu0 0.0
    %520 = vmatprep.subr.mxu0 0.0
    %521 = vmatpush1.msra.mxu0 0.0
    %522 = vmatprep.subr.mxu0 0.0
    %523 = vmatpush1.msra.mxu0 0.0
    %524 = vmatprep.subr.mxu0 0.0
    %525 = vmatpush1.msra.mxu0 0.0
    %526 = vmatprep.subr.mxu0 0.0
    %527 = vmatpush1.msra.mxu0 0.0
    %528 = vmatprep.subr.mxu0 0.0
    %529 = vmatpush1.msra.mxu0 0.0
    %530 = vmatprep.mubr.f32.mxu0 0.0
    %531 = vmatmul.mubr.f32.gmra.mrb[0].mxu0 %v464
    %v532 = vpop.f32.mrb[0].mxu0
    %v533 = vadd.f32 0.0, %v532
    %v534 = vpop.f32.mrb[0].mxu0
    %535 = vdwg.mxu0
    %v536 = vmax.f32 %v533, 0.0
    %v537 = vadd.f32 %v368, %v536
    %vm538 = vcmask 31744
    %v540 = vsel %vm538, %v537, 0
    %vm542 = vcmask 1043456
    %v544 = vsel %vm542, %v182, 0
    %546 = vmatprep.subr.mxu0 0.0
    %547 = vmatpush1.msra.mxu0 %v544
    %548 = vmatprep.subr.mxu0 0.0
    %549 = vmatpush1.msra.mxu0 0.0
    %550 = vmatprep.subr.mxu0 0.0
    %551 = vmatpush1.msra.mxu0 0.0
    %552 = vmatprep.subr.mxu0 0.0
    %553 = vmatpush1.msra.mxu0 0.0
    %554 = vmatprep.subr.mxu0 0.0
    %555 = vmatpush1.msra.mxu0 0.0
    %556 = vmatprep.subr.mxu0 0.0
    %557 = vmatpush1.msra.mxu0 0.0
    %558 = vmatprep.subr.mxu0 0.0
    %559 = vmatpush1.msra.mxu0 0.0
    %560 = vmatprep.subr.mxu0 0.0
    %561 = vmatpush1.msra.mxu0 0.0
    %562 = vmatprep.subr.mxu0 0.0
    %563 = vmatpush1.msra.mxu0 0.0
    %564 = vmatprep.subr.mxu0 0.0
    %565 = vmatpush1.msra.mxu0 0.0
    %566 = vmatprep.subr.mxu0 0.0
    %567 = vmatpush1.msra.mxu0 0.0
    %568 = vmatprep.subr.mxu0 0.0
    %569 = vmatpush1.msra.mxu0 0.0
    %570 = vmatprep.subr.mxu0 0.0
    %571 = vmatpush1.msra.mxu0 0.0
    %572 = vmatprep.subr.mxu0 0.0
    %573 = vmatpush1.msra.mxu0 0.0
    %574 = vmatprep.subr.mxu0 0.0
    %575 = vmatpush1.msra.mxu0 0.0
    %576 = vmatprep.subr.mxu0 0.0
    %577 = vmatpush1.msra.mxu0 0.0
    %578 = vmatprep.subr.mxu0 0.0
    %579 = vmatpush1.msra.mxu0 0.0
    %580 = vmatprep.subr.mxu0 0.0
    %581 = vmatpush1.msra.mxu0 0.0
    %582 = vmatprep.subr.mxu0 0.0
    %583 = vmatpush1.msra.mxu0 0.0
    %584 = vmatprep.subr.mxu0 0.0
    %585 = vmatpush1.msra.mxu0 0.0
    %586 = vmatprep.subr.mxu0 0.0
    %587 = vmatpush1.msra.mxu0 0.0
    %588 = vmatprep.subr.mxu0 0.0
    %589 = vmatpush1.msra.mxu0 0.0
    %590 = vmatprep.subr.mxu0 0.0
    %591 = vmatpush1.msra.mxu0 0.0
    %592 = vmatprep.subr.mxu0 0.0
    %593 = vmatpush1.msra.mxu0 0.0
    %594 = vmatprep.subr.mxu0 0.0
    %595 = vmatpush1.msra.mxu0 0.0
    %596 = vmatprep.subr.mxu0 0.0
    %597 = vmatpush1.msra.mxu0 0.0
    %598 = vmatprep.subr.mxu0 0.0
    %599 = vmatpush1.msra.mxu0 0.0
    %600 = vmatprep.subr.mxu0 0.0
    %601 = vmatpush1.msra.mxu0 0.0
    %602 = vmatprep.subr.mxu0 0.0
    %603 = vmatpush1.msra.mxu0 0.0
    %604 = vmatprep.subr.mxu0 0.0
    %605 = vmatpush1.msra.mxu0 0.0
    %606 = vmatprep.subr.mxu0 0.0
    %607 = vmatpush1.msra.mxu0 0.0
    %608 = vmatprep.subr.mxu0 0.0
    %609 = vmatpush1.msra.mxu0 0.0
    %610 = vmatprep.mubr.f32.mxu0 0.0
    %611 = vmatmul.mubr.f32.gmra.mrb[0].mxu0 %v540
    %v612 = vpop.f32.mrb[0].mxu0
    %v613 = vadd.f32 0.0, %v612
    %v614 = vpop.f32.mrb[0].mxu0
    %615 = vdwg.mxu0
    %v616 = vxor.u32 %v613, 2147483648
    %v617 = vmul.f32 %v616, 1.442695
    %v618 = vpow.pop %v617
    %v619 = vadd.f32 %v618, 1.0
    %v620 = vrcp.pop %v619
    %v621 = vmul.f32 1.0, %v620
    %vm622 = vcmask 517120
    %623 = vst.msk [vmem:[#allocation5] sm:$0x3] %vm622, %v621
    // Predicated region
    $region18: #{tpu_custom_call.1} parent=1 // pred_check
      _
    $region19: #{tpu_custom_call.1} parent=1 // pred_check_branch
      %625 = sbr.rel (0) target = $region21
    $region20: #{tpu_custom_call.1} parent=1 // pred_region
      %s627 = ssub.s32 32, 32
      %628 = vsyncadd [#allocation4], %s627
      %s630 = sshll.u32 [#allocation5], 4
      %s631 = int_to_ptr.vmem [resolvable:$true] %s630
      %633 = dma.vmem_to_hbm [thread:$0]  %s631, 32, %s3, [#allocation4]
    $region21: #{tpu_custom_call.1} parent=1 // pred_fallthru
      _
    // Predicated region
    $region22: #{tpu_custom_call.1} parent=1 // pred_check
      _
    $region23: #{tpu_custom_call.1} parent=1 // pred_check_branch
      %635 = sbr.rel (0) target = $region25
    $region24: #{tpu_custom_call.1} parent=1 // pred_region
      %636 = dma.done [#allocation4], 32
    $region25: #{tpu_custom_call.1} parent=1 // pred_fallthru
      _
    %637 = vsyncpa [#allocation3], 1
    %638 = vsyncpa [#allocation4], 1

</llo_original>
